<compile_context>
chip_gen: v7x
topology: tpu7x:2x2x1
jax: 0.10.0
libtpu: 0.0.40
codegen_flags: <defaults>
</compile_context>

<pallas_src>
import functools

import jax
import jax.numpy as jnp
from jax import lax
from jax.experimental import pallas as pl
from jax.experimental.pallas import tpu as pltpu


def _mlp_kernel(x_ref, w1_ref, b1_ref, w2_ref, b2_ref, o_ref, *, n_valid):
    # fc1: (TB, in) @ (in, hidden) + (1, hidden), then ReLU
    x = x_ref[...]
    h = jnp.dot(x, w1_ref[...], preferred_element_type=jnp.float32) + b1_ref[...]
    h = jnp.maximum(h, 0.0)

    # fc2: (TB, hidden) @ (hidden, N_pad) + (1, N_pad)   (N_pad = 128, lane-dense)
    out = jnp.dot(h, w2_ref[...], preferred_element_type=jnp.float32) + b2_ref[...]

    # sigmoid (EUP exp + reciprocal path, numerically clean form)
    s = jax.nn.sigmoid(out)

    # log_softmax over the *valid* class lanes only (padded lanes are masked
    # out of the max / sum; their output values are garbage and sliced off in
    # the wrapper).
    lane = lax.broadcasted_iota(jnp.int32, s.shape, dimension=1)
    valid = lane < n_valid
    m = jnp.max(jnp.where(valid, s, jnp.float32(-1e30)), axis=1, keepdims=True)
    z = s - m
    denom = jnp.sum(jnp.where(valid, jnp.exp(z), 0.0), axis=1, keepdims=True)
    o_ref[...] = (z - jnp.log(denom)).astype(o_ref.dtype)


def _round_up(x, m):
    return ((x + m - 1) // m) * m


def multilayer_forward(x, w1, b1, w2, b2, input_size, *, block_b=256):
    """Forward pass of Multilayer. w1:(in,hidden) w2:(hidden,10), i.e. transposed
    relative to torch.nn.Linear.weight so the kernel does plain x @ W + b."""
    x2d = x.reshape(-1, input_size).astype(jnp.float32)
    batch = x2d.shape[0]
    hidden = w1.shape[1]
    n_out = w2.shape[1]

    # Lane-dense output slab: pad class dim to a multiple of 128.
    n_pad = _round_up(n_out, 128)

    # Batch tile: multiple of 8 sublanes, capped by the (padded) batch.
    tb = _round_up(min(block_b, _round_up(batch, 8)), 8)
    b_pad = _round_up(batch, tb)

    x_p = jnp.pad(x2d, ((0, b_pad - batch), (0, 0))) if b_pad != batch else x2d
    w1f = w1.astype(jnp.float32)
    b1r = b1.reshape(1, hidden).astype(jnp.float32)
    w2p = jnp.pad(w2.astype(jnp.float32), ((0, 0), (0, n_pad - n_out)))
    b2p = jnp.pad(b2.reshape(1, n_out).astype(jnp.float32),
                  ((0, 0), (0, n_pad - n_out)))

    grid = (b_pad // tb,)

    flops = 2 * b_pad * (input_size * hidden + hidden * n_pad)
    transcendentals = 2 * b_pad * n_pad  # sigmoid exp + softmax exp (approx)
    bytes_accessed = 4 * (b_pad * input_size + input_size * hidden + hidden
                          + hidden * n_pad + n_pad + b_pad * n_pad)

    kernel = functools.partial(_mlp_kernel, n_valid=n_out)

    out_p = pl.pallas_call(
        kernel,
        out_shape=jax.ShapeDtypeStruct((b_pad, n_pad), jnp.float32),
        grid_spec=pltpu.PrefetchScalarGridSpec(
            num_scalar_prefetch=0,
            grid=grid,
            in_specs=[
                # x: tiled along batch, double-buffered by the pipeline
                pl.BlockSpec((tb, input_size), lambda i: (i, 0)),
                # weights / biases: constant block index -> VMEM-resident
                pl.BlockSpec((input_size, hidden), lambda i: (0, 0)),
                pl.BlockSpec((1, hidden), lambda i: (0, 0)),
                pl.BlockSpec((hidden, n_pad), lambda i: (0, 0)),
                pl.BlockSpec((1, n_pad), lambda i: (0, 0)),
            ],
            out_specs=pl.BlockSpec((tb, n_pad), lambda i: (i, 0)),
        ),
        compiler_params=pltpu.CompilerParams(
            dimension_semantics=("parallel",),
        ),
        cost_estimate=pl.CostEstimate(
            flops=flops,
            transcendentals=transcendentals,
            bytes_accessed=bytes_accessed,
        ),
    )(x_p, w1f, b1r, w2p, b2p)

    # Drop batch padding and the padded class lanes.
    return out_p[:batch, :n_out]


if __name__ == "__main__":
    # Small shapes consistent with the module's forward:
    #   x of shape (4, 4, 32) -> view(-1, input_size) with input_size = 32
    #   hidden_size = 32, output classes = 10.
    input_size = 32
    hidden_size = 32
    out_classes = 10

    key = jax.random.PRNGKey(0)
    kx, kw1, kb1, kw2, kb2 = jax.random.split(key, 5)

    x = jax.random.normal(kx, (4, 4, 32), dtype=jnp.float32)  # -> batch 16

    # Deterministic parameter init (PyTorch-Linear-style uniform bounds).
    bound1 = 1.0 / (input_size ** 0.5)
    w1 = jax.random.uniform(kw1, (input_size, hidden_size),
                            minval=-bound1, maxval=bound1, dtype=jnp.float32)
    b1 = jax.random.uniform(kb1, (hidden_size,),
                            minval=-bound1, maxval=bound1, dtype=jnp.float32)

    bound2 = 1.0 / (hidden_size ** 0.5)
    w2 = jax.random.uniform(kw2, (hidden_size, out_classes),
                            minval=-bound2, maxval=bound2, dtype=jnp.float32)
    b2 = jax.random.uniform(kb2, (out_classes,),
                            minval=-bound2, maxval=bound2, dtype=jnp.float32)

    # block_b=8 so the batch of 16 exercises a 2-step grid (pipelined path).
    out = multilayer_forward(x, w1, b1, w2, b2, input_size, block_b=8)
    out = jax.block_until_ready(out)

    # Pure-JAX reference of the same forward.
    x2d = x.reshape(-1, input_size)
    h = jnp.maximum(x2d @ w1 + b1, 0.0)
    o = jax.nn.sigmoid(h @ w2 + b2)
    ref = jax.nn.log_softmax(o, axis=1)

    assert out.shape == (16, out_classes), out.shape
    assert jnp.allclose(out, ref, atol=1e-5, rtol=1e-5), float(
        jnp.max(jnp.abs(out - ref)))

    print("KERNEL_OK")
</pallas_src>

<mosaic_0001>
module attributes {stable_mosaic.version = 11 : i64} {
  func.func @_mlp_kernel(%arg0: i32, %arg1: memref<8x32xf32, #tpu.memory_space<vmem>>, %arg2: memref<32x32xf32, #tpu.memory_space<vmem>>, %arg3: memref<1x32xf32, #tpu.memory_space<vmem>>, %arg4: memref<32x128xf32, #tpu.memory_space<vmem>>, %arg5: memref<1x128xf32, #tpu.memory_space<vmem>>, %arg6: memref<8x128xf32, #tpu.memory_space<vmem>>) attributes {dimension_semantics = [#tpu.dimension_semantics<parallel>], iteration_bounds = array<i64: 2>, scalar_prefetch = 0 : i64, scratch_operands = 0 : i64, tpu.core_type = #tpu.core_type<tc>, window_params = [{transform_indices = @transform_0, window_bounds = array<i64: 8, 32>}, {pipeline_mode = #tpu.pipeline_mode<synchronous>, transform_indices = @transform_1, window_bounds = array<i64: 32, 32>}, {pipeline_mode = #tpu.pipeline_mode<synchronous>, transform_indices = @transform_2, window_bounds = array<i64: 1, 32>}, {pipeline_mode = #tpu.pipeline_mode<synchronous>, transform_indices = @transform_3, window_bounds = array<i64: 32, 128>}, {pipeline_mode = #tpu.pipeline_mode<synchronous>, transform_indices = @transform_4, window_bounds = array<i64: 1, 128>}, {transform_indices = @transform_5, window_bounds = array<i64: 8, 128>}]} {
    %c0 = arith.constant 0 : index
    %c0_0 = arith.constant 0 : index
    %0 = vector.load %arg1[%c0, %c0_0] : memref<8x32xf32, #tpu.memory_space<vmem>>, vector<8x32xf32>
    %c0_1 = arith.constant 0 : index
    %c0_2 = arith.constant 0 : index
    %1 = vector.load %arg2[%c0_1, %c0_2] : memref<32x32xf32, #tpu.memory_space<vmem>>, vector<32x32xf32>
    %cst = arith.constant dense<0.000000e+00> : vector<8x32xf32>
    %2 = tpu.matmul %0, %1, %cst {dimension_numbers = #tpu.dot_dimension_numbers<[1], [0], [0], [1], [0, 0, 1, 1], [], []>} : vector<8x32xf32>, vector<32x32xf32>, vector<8x32xf32> -> vector<8x32xf32>
    %c0_3 = arith.constant 0 : index
    %c0_4 = arith.constant 0 : index
    %3 = vector.load %arg3[%c0_3, %c0_4] : memref<1x32xf32, #tpu.memory_space<vmem>>, vector<1x32xf32>
    %4 = vector.broadcast %3 : vector<1x32xf32> to vector<8x32xf32>
    %5 = arith.addf %2, %4 : vector<8x32xf32>
    %cst_5 = arith.constant 0.000000e+00 : f32
    %6 = vector.broadcast %cst_5 : f32 to vector<8x32xf32>
    %7 = arith.maximumf %5, %6 : vector<8x32xf32>
    %c0_6 = arith.constant 0 : index
    %c0_7 = arith.constant 0 : index
    %8 = vector.load %arg4[%c0_6, %c0_7] : memref<32x128xf32, #tpu.memory_space<vmem>>, vector<32x128xf32>
    %cst_8 = arith.constant dense<0.000000e+00> : vector<8x128xf32>
    %9 = tpu.matmul %7, %8, %cst_8 {dimension_numbers = #tpu.dot_dimension_numbers<[1], [0], [0], [1], [0, 0, 1, 1], [], []>} : vector<8x32xf32>, vector<32x128xf32>, vector<8x128xf32> -> vector<8x128xf32>
    %c0_9 = arith.constant 0 : index
    %c0_10 = arith.constant 0 : index
    %10 = vector.load %arg5[%c0_9, %c0_10] : memref<1x128xf32, #tpu.memory_space<vmem>>, vector<1x128xf32>
    %11 = vector.broadcast %10 : vector<1x128xf32> to vector<8x128xf32>
    %12 = arith.addf %9, %11 : vector<8x128xf32>
    %13 = arith.negf %12 : vector<8x128xf32>
    %14 = math.exp %13 : vector<8x128xf32>
    %cst_11 = arith.constant 1.000000e+00 : f32
    %15 = vector.broadcast %cst_11 : f32 to vector<8x128xf32>
    %16 = arith.addf %15, %14 : vector<8x128xf32>
    %17 = arith.divf %15, %16 : vector<8x128xf32>
    %18 = tpu.iota {dimensions = array<i32: 1>} : vector<8x128xi32>
    %c10_i32 = arith.constant 10 : i32
    %19 = vector.broadcast %c10_i32 : i32 to vector<8x128xi32>
    %20 = arith.cmpi slt, %18, %19 : vector<8x128xi32>
    %cst_12 = arith.constant -1.000000e+30 : f32
    %21 = vector.broadcast %cst_12 : f32 to vector<8x128xf32>
    %22 = arith.select %20, %17, %21 : vector<8x128xi1>, vector<8x128xf32>
    %cst_13 = arith.constant dense<0xFF800000> : vector<8xf32>
    %23 = vector.multi_reduction <maximumf>, %22, %cst_13 [1] : vector<8x128xf32> to vector<8xf32>
    %24 = vector.shape_cast %23 : vector<8xf32> to vector<8x1xf32>
    %25 = vector.broadcast %24 : vector<8x1xf32> to vector<8x128xf32>
    %26 = arith.subf %17, %25 : vector<8x128xf32>
    %27 = math.exp %26 : vector<8x128xf32>
    %cst_14 = arith.constant 0.000000e+00 : f32
    %28 = vector.broadcast %cst_14 : f32 to vector<8x128xf32>
    %29 = arith.select %20, %27, %28 : vector<8x128xi1>, vector<8x128xf32>
    %cst_15 = arith.constant dense<0.000000e+00> : vector<8xf32>
    %30 = vector.multi_reduction <add>, %29, %cst_15 [1] : vector<8x128xf32> to vector<8xf32>
    %31 = vector.shape_cast %30 : vector<8xf32> to vector<8x1xf32>
    %32 = math.log %31 : vector<8x1xf32>
    %33 = vector.broadcast %32 : vector<8x1xf32> to vector<8x128xf32>
    %34 = arith.subf %26, %33 : vector<8x128xf32>
    %c0_16 = arith.constant 0 : index
    %c0_17 = arith.constant 0 : index
    %35 = vector.load %arg6[%c0_16, %c0_17] : memref<8x128xf32, #tpu.memory_space<vmem>>, vector<8x128xf32>
    tpu.vector_store %arg6[%c0_16, %c0_17], %34 {strides = array<i32>} : memref<8x128xf32, #tpu.memory_space<vmem>>, vector<8x128xf32>,
    return
  }
  func.func @transform_0(%arg0: i32) -> (i32, i32) {
    %c0_i32 = arith.constant 0 : i32
    %c0_i32_0 = arith.constant 0 : i32
    return %arg0, %c0_i32 : i32, i32
  }
  func.func @transform_1(%arg0: i32) -> (i32, i32) {
    %c0_i32 = arith.constant 0 : i32
    %c0_i32_0 = arith.constant 0 : i32
    %c0_i32_1 = arith.constant 0 : i32
    return %c0_i32, %c0_i32_0 : i32, i32
  }
  func.func @transform_2(%arg0: i32) -> (i32, i32) {
    %c0_i32 = arith.constant 0 : i32
    %c0_i32_0 = arith.constant 0 : i32
    %c0_i32_1 = arith.constant 0 : i32
    return %c0_i32, %c0_i32_0 : i32, i32
  }
  func.func @transform_3(%arg0: i32) -> (i32, i32) {
    %c0_i32 = arith.constant 0 : i32
    %c0_i32_0 = arith.constant 0 : i32
    %c0_i32_1 = arith.constant 0 : i32
    return %c0_i32, %c0_i32_0 : i32, i32
  }
  func.func @transform_4(%arg0: i32) -> (i32, i32) {
    %c0_i32 = arith.constant 0 : i32
    %c0_i32_0 = arith.constant 0 : i32
    %c0_i32_1 = arith.constant 0 : i32
    return %c0_i32, %c0_i32_0 : i32, i32
  }
  func.func @transform_5(%arg0: i32) -> (i32, i32) {
    %c0_i32 = arith.constant 0 : i32
    %c0_i32_0 = arith.constant 0 : i32
    return %arg0, %c0_i32 : i32, i32
  }
}

</mosaic_0001>

<llo_original>
// kernel: tpu_custom_call.1
$region0: #{tpu_custom_call.1}
  #allocation0 [shape = 'u32[]', space=smem, size = 0x4, offset = 0x4, fixed_abs, tag = 'smem constant byte address 0x4 - core index']
  #allocation1 [shape = 'u32[144,128]{1,0:T(1,128)}', space=vmem, size = 0x12000, scoped, tag = 'internal scratch']
  %s0 = inlined_call_operand.hbm [shape: f32[16,32], index: 0, kind: input, shape index: {}]
  %s1 = inlined_call_operand.hbm [shape: f32[32,32], index: 1, kind: input, shape index: {}]
  %s2 = inlined_call_operand.vmem [shape: f32[1,32], index: 2, kind: input, shape index: {}]
  %s3 = inlined_call_operand.hbm [shape: f32[32,128], index: 3, kind: input, shape index: {}]
  %s4 = inlined_call_operand.vmem [shape: f32[1,128], index: 4, kind: input, shape index: {}]
  %s5 = inlined_call_operand.hbm [shape: f32[16,128], index: 5, kind: output, shape index: {}]
  %s6 = sld [smem:[#allocation0]]
  $region65: #{tpu_custom_call.1} parent=0
    _
  %s8 = ssub.s32 1, %s6
  %s9 = scalar_select 0, %s8, %s6
  $region1: #{tpu_custom_call.1} parent=0
    #allocation2 [shape = 'u8[8192]{0}', space=vmem, size = 0x2000, scoped, tag = 'input window, operand 0']
    #allocation3 [shape = 's32[2]{0}', space=sflag, size = 0x8, scoped, tag = 'scoped memory for tpu_custom_call.1']
    #allocation4 [shape = 's32[2]{0}', space=sflag, size = 0x8, scoped, tag = 'scoped memory for tpu_custom_call.1']
    #allocation5 [shape = 'u8[16384]{0}', space=vmem, size = 0x4000, scoped, tag = 'input window, operand 1, single buffered']
    #allocation6 [shape = 's32[1]{0}', space=sflag, size = 0x4, scoped, tag = 'scoped memory for tpu_custom_call.1']
    #allocation7 [shape = 'u8[16384]{0}', space=vmem, size = 0x4000, scoped, tag = 'input window, operand 3, single buffered']
    #allocation8 [shape = 'u8[8192]{0}', space=vmem, size = 0x2000, scoped, tag = 'output window, operand 0']
    %10 = vsyncpa [#allocation3], 0
    %s11 = scalar_lea.sflag [#allocation3], 1
    %12 = vsyncpa %s11, 0
    %13 = vsyncpa [#allocation6], 0
    %14 = vsyncpa [#allocation4], 0
    %s15 = scalar_lea.sflag [#allocation4], 1
    %16 = vsyncpa %s15, 0
    loop: start=0, step=1, limit=4
    $region2: #{tpu_custom_call.1} parent=1 // loop_pre_header
      _
    $region3: #{tpu_custom_call.1} parent=1 // loop_header
      %s18 = sphi 0, %s22
      %p19 = scmp.ge.s32.totalorder %s18, 4
      %s28 = sphi 0, %s30
      %s31 = sphi 0, %s28
      %s32 = sphi 0, %s31
      %s48 = sphi 0, %s32
      %s52 = sphi 0, %s52
      %s54 = sphi 0, %s52
      %s55 = sphi 0, %s54
      %s69 = sphi 0, %s55
      %s73 = sphi 0, %s73
      %s75 = sphi 0, %s73
      %s76 = sphi 0, %s75
      %s90 = sphi 0, %s76
      %s94 = sphi 0, %s94
      %s96 = sphi 0, %s94
      %s97 = sphi 0, %s96
      %s111 = sphi 0, %s97
      %s115 = sphi 0, %s115
      %s117 = sphi 0, %s115
      %s118 = sphi 0, %s117
      %s132 = sphi 0, %s118
      %s138 = sphi 0, %s140
      %s141 = sphi 0, %s138
      %s142 = sphi 0, %s141
      %s158 = sphi 0, %s142
    $region4: #{tpu_custom_call.1} parent=1 // loop_header_branch
      %21 = sbr.rel (%p19) target = $region8
    $region5: #{tpu_custom_call.1} parent=1 // loop_body
      %s23 = ssub.s32 %s18, 1
      %s24 = ssub.s32 %s18, 2
      %s25 = sadd.s32 %s18, 1
      %s26 = ssub.s32 %s18, %s25
      %p27 = scmp.eq.s32.totalorder %s26, 0
      %s29 = sadd.s32 %s28, 1
      %s30 = scalar_select %p27, %s28, %s29
      %p33 = pneg %p27
      %p34 = scmp.eq.s32.totalorder %s18, 1
      %p35 = por %p33, %p34
      %p36 = scmp.ne.s32.totalorder %s28, %s31
      %p37 = scmp.eq.s32.totalorder %s18, 0
      %p38 = por %p36, %p37
      %p39 = scmp.ne.s32.totalorder %s28, %s31
      %p40 = scmp.eq.s32.totalorder %s23, 1
      %p41 = por %p39, %p40
      %p42 = scmp.ne.s32.totalorder %s31, %s32
      %p43 = scmp.eq.s32.totalorder %s23, 0
      %p44 = por %p42, %p43
      %p45 = scmp.ne.s32.totalorder %s31, %s32
      %p46 = scmp.eq.s32.totalorder %s24, 1
      %p47 = por %p45, %p46
      %p49 = scmp.ne.s32.totalorder %s32, %s48
      %p50 = scmp.eq.s32.totalorder %s24, 0
      %p51 = por %p49, %p50
      %s53 = sadd.s32 %s52, 1
      %p56 = scmp.eq.s32.totalorder %s18, 1
      %p57 = scmp.ne.s32.totalorder %s52, %s54
      %p58 = scmp.eq.s32.totalorder %s18, 0
      %p59 = por %p57, %p58
      %p60 = scmp.ne.s32.totalorder %s52, %s54
      %p61 = scmp.eq.s32.totalorder %s23, 1
      %p62 = por %p60, %p61
      %p63 = scmp.ne.s32.totalorder %s54, %s55
      %p64 = scmp.eq.s32.totalorder %s23, 0
      %p65 = por %p63, %p64
      %p66 = scmp.ne.s32.totalorder %s54, %s55
      %p67 = scmp.eq.s32.totalorder %s24, 1
      %p68 = por %p66, %p67
      %p70 = scmp.ne.s32.totalorder %s55, %s69
      %p71 = scmp.eq.s32.totalorder %s24, 0
      %p72 = por %p70, %p71
      %s74 = sadd.s32 %s73, 1
      %p77 = scmp.eq.s32.totalorder %s18, 1
      %p78 = scmp.ne.s32.totalorder %s73, %s75
      %p79 = scmp.eq.s32.totalorder %s18, 0
      %p80 = por %p78, %p79
      %p81 = scmp.ne.s32.totalorder %s73, %s75
      %p82 = scmp.eq.s32.totalorder %s23, 1
      %p83 = por %p81, %p82
      %p84 = scmp.ne.s32.totalorder %s75, %s76
      %p85 = scmp.eq.s32.totalorder %s23, 0
      %p86 = por %p84, %p85
      %p87 = scmp.ne.s32.totalorder %s75, %s76
      %p88 = scmp.eq.s32.totalorder %s24, 1
      %p89 = por %p87, %p88
      %p91 = scmp.ne.s32.totalorder %s76, %s90
      %p92 = scmp.eq.s32.totalorder %s24, 0
      %p93 = por %p91, %p92
      %s95 = sadd.s32 %s94, 1
      %p98 = scmp.eq.s32.totalorder %s18, 1
      %p99 = scmp.ne.s32.totalorder %s94, %s96
      %p100 = scmp.eq.s32.totalorder %s18, 0
      %p101 = por %p99, %p100
      %p102 = scmp.ne.s32.totalorder %s94, %s96
      %p103 = scmp.eq.s32.totalorder %s23, 1
      %p104 = por %p102, %p103
      %p105 = scmp.ne.s32.totalorder %s96, %s97
      %p106 = scmp.eq.s32.totalorder %s23, 0
      %p107 = por %p105, %p106
      %p108 = scmp.ne.s32.totalorder %s96, %s97
      %p109 = scmp.eq.s32.totalorder %s24, 1
      %p110 = por %p108, %p109
      %p112 = scmp.ne.s32.totalorder %s97, %s111
      %p113 = scmp.eq.s32.totalorder %s24, 0
      %p114 = por %p112, %p113
      %s116 = sadd.s32 %s115, 1
      %p119 = scmp.eq.s32.totalorder %s18, 1
      %p120 = scmp.ne.s32.totalorder %s115, %s117
      %p121 = scmp.eq.s32.totalorder %s18, 0
      %p122 = por %p120, %p121
      %p123 = scmp.ne.s32.totalorder %s115, %s117
      %p124 = scmp.eq.s32.totalorder %s23, 1
      %p125 = por %p123, %p124
      %p126 = scmp.ne.s32.totalorder %s117, %s118
      %p127 = scmp.eq.s32.totalorder %s23, 0
      %p128 = por %p126, %p127
      %p129 = scmp.ne.s32.totalorder %s117, %s118
      %p130 = scmp.eq.s32.totalorder %s24, 1
      %p131 = por %p129, %p130
      %p133 = scmp.ne.s32.totalorder %s118, %s132
      %p134 = scmp.eq.s32.totalorder %s24, 0
      %p135 = por %p133, %p134
      %s136 = ssub.s32 %s18, %s25
      %p137 = scmp.eq.s32.totalorder %s136, 0
      %s139 = sadd.s32 %s138, 1
      %s140 = scalar_select %p137, %s138, %s139
      %p143 = pneg %p137
      %p144 = scmp.eq.s32.totalorder %s18, 1
      %p145 = por %p143, %p144
      %p146 = scmp.ne.s32.totalorder %s138, %s141
      %p147 = scmp.eq.s32.totalorder %s18, 0
      %p148 = por %p146, %p147
      %p149 = scmp.ne.s32.totalorder %s138, %s141
      %p150 = scmp.eq.s32.totalorder %s23, 1
      %p151 = por %p149, %p150
      %p152 = scmp.ne.s32.totalorder %s141, %s142
      %p153 = scmp.eq.s32.totalorder %s23, 0
      %p154 = por %p152, %p153
      %p155 = scmp.ne.s32.totalorder %s141, %s142
      %p156 = scmp.eq.s32.totalorder %s24, 1
      %p157 = por %p155, %p156
      %p159 = scmp.ne.s32.totalorder %s142, %s158
      %p160 = scmp.eq.s32.totalorder %s24, 0
      %p161 = por %p159, %p160
      %p162 = scmp.le.s32.totalorder 1, %s18
      %p163 = scmp.lt.s32.totalorder %s18, 3
      %p164 = pnand %p162, %p163
      %p165 = pneg %p164
      // Predicated region
      $region9: #{tpu_custom_call.1} parent=5 // pred_check
        _
      $region10: #{tpu_custom_call.1} parent=5 // pred_check_branch
        %167 = sbr.rel (%p164) target = $region12
      $region11: #{tpu_custom_call.1} parent=5 // pred_region
        %s168 = ssub.s32 %s18, 1
        // Predicated region
        $region13: #{tpu_custom_call.1} parent=11 // pred_check
          %p169 = pneg %p65
        $region14: #{tpu_custom_call.1} parent=11 // pred_check_branch
          %171 = sbr.rel (%p169) target = $region16
        $region15: #{tpu_custom_call.1} parent=11 // pred_region
          %s173 = ssub.s32 512, 512
          %174 = vsyncadd [#allocation6], %s173
          %s175 = sshll.u32 [#allocation5], 4
          %s176 = int_to_ptr.vmem [resolvable:$true] %s175
          %181 = dma.hbm_to_vmem [thread:$0]  %s1, 512, %s176, [#allocation6], 128, 128, 8
        $region16: #{tpu_custom_call.1} parent=11 // pred_fallthru
          _
        // Predicated region
        $region17: #{tpu_custom_call.1} parent=11 // pred_check
          %p182 = pneg %p86
        $region18: #{tpu_custom_call.1} parent=11 // pred_check_branch
          %184 = sbr.rel (%p182) target = $region20
        $region19: #{tpu_custom_call.1} parent=11 // pred_region
          _
        $region20: #{tpu_custom_call.1} parent=11 // pred_fallthru
          _
        // Predicated region
        $region21: #{tpu_custom_call.1} parent=11 // pred_check
          %p185 = pneg %p107
        $region22: #{tpu_custom_call.1} parent=11 // pred_check_branch
          %187 = sbr.rel (%p185) target = $region24
        $region23: #{tpu_custom_call.1} parent=11 // pred_region
          %s189 = ssub.s32 512, 512
          %190 = vsyncadd [#allocation6], %s189
          %s191 = sshll.u32 [#allocation7], 4
          %s192 = int_to_ptr.vmem [resolvable:$true] %s191
          %197 = dma.hbm_to_vmem [thread:$0]  %s3, 512, %s192, [#allocation6], 128, 128, 8
        $region24: #{tpu_custom_call.1} parent=11 // pred_fallthru
          _
        // Predicated region
        $region25: #{tpu_custom_call.1} parent=11 // pred_check
          %p198 = pneg %p128
        $region26: #{tpu_custom_call.1} parent=11 // pred_check_branch
          %200 = sbr.rel (%p198) target = $region28
        $region27: #{tpu_custom_call.1} parent=11 // pred_region
          _
        $region28: #{tpu_custom_call.1} parent=11 // pred_fallthru
          _
      $region12: #{tpu_custom_call.1} parent=5 // pred_fallthru
        _
      %p201 = scmp.lt.s32.totalorder %s18, 2
      // Predicated region
      $region29: #{tpu_custom_call.1} parent=5 // pred_check
        %p202 = pneg %p201
      $region30: #{tpu_custom_call.1} parent=5 // pred_check_branch
        %204 = sbr.rel (%p202) target = $region32
      $region31: #{tpu_custom_call.1} parent=5 // pred_region
        // Predicated region
        $region33: #{tpu_custom_call.1} parent=31 // pred_check
          %p205 = pneg %p38
        $region34: #{tpu_custom_call.1} parent=31 // pred_check_branch
          %207 = sbr.rel (%p205) target = $region36
        $region35: #{tpu_custom_call.1} parent=31 // pred_region
          %s208 = sand.u32 %s28, 1
          %s209 = scalar_lea.sflag [#allocation3], %s208
          %s210 = sand.u32 %s28, 1
          %s211 = smul.addr %s210, 8
          %s212 = scalar_lea.vmem [#allocation2], %s211
          %s214 = ssub.s32 128, 128
          %215 = vsyncadd %s209, %s214
          %s216 = smul.addr %s18, 128
          %s217 = scalar_lea.hbm %s0, %s216
          %s219 = sshll.u32 %s212, 4
          %s220 = int_to_ptr.vmem [resolvable:$true] %s219
          %222 = dma.hbm_to_vmem [thread:$0]  %s217, 128, %s220, %s209
        $region36: #{tpu_custom_call.1} parent=31 // pred_fallthru
          _
      $region32: #{tpu_custom_call.1} parent=5 // pred_fallthru
        _
      %p223 = scmp.le.s32.totalorder 1, %s18
      %p224 = scmp.lt.s32.totalorder %s18, 3
      %p225 = pnand %p223, %p224
      %p226 = pneg %p225
      // Predicated region
      $region37: #{tpu_custom_call.1} parent=5 // pred_check
        _
      $region38: #{tpu_custom_call.1} parent=5 // pred_check_branch
        %228 = sbr.rel (%p225) target = $region40
      $region39: #{tpu_custom_call.1} parent=5 // pred_region
        %s229 = ssub.s32 %s18, 1
        %s230 = sand.u32 %s31, 1
        %s231 = scalar_lea.sflag [#allocation3], %s230
        %s232 = sand.u32 %s31, 1
        %s233 = smul.addr %s232, 8
        %s234 = scalar_lea.vmem [#allocation2], %s233
        // Predicated region
        $region41: #{tpu_custom_call.1} parent=39 // pred_check
          %p235 = pneg %p44
        $region42: #{tpu_custom_call.1} parent=39 // pred_check_branch
          %237 = sbr.rel (%p235) target = $region44
        $region43: #{tpu_custom_call.1} parent=39 // pred_region
          %238 = dma.done %s231, 128
        $region44: #{tpu_custom_call.1} parent=39 // pred_fallthru
          _
        // Predicated region
        $region45: #{tpu_custom_call.1} parent=39 // pred_check
          %p239 = pneg %p65
        $region46: #{tpu_custom_call.1} parent=39 // pred_check_branch
          %241 = sbr.rel (%p239) target = $region48
        $region47: #{tpu_custom_call.1} parent=39 // pred_region
          %242 = dma.done [#allocation6], 512
        $region48: #{tpu_custom_call.1} parent=39 // pred_fallthru
          _
        // Predicated region
        $region49: #{tpu_custom_call.1} parent=39 // pred_check
          %p243 = pneg %p107
        $region50: #{tpu_custom_call.1} parent=39 // pred_check_branch
          %245 = sbr.rel (%p243) target = $region52
        $region51: #{tpu_custom_call.1} parent=39 // pred_region
          %246 = dma.done [#allocation6], 512
        $region52: #{tpu_custom_call.1} parent=39 // pred_fallthru
          _
        %s247 = sand.u32 %s31, 1
        %s248 = scalar_lea.sflag [#allocation3], %s247
        %s249 = sand.u32 %s31, 1
        %s250 = smul.addr %s249, 8
        %s251 = scalar_lea.vmem [#allocation2], %s250
        %p252 = pneg %p44
        %p253 = pneg %p41
        %p254 = pneg %p65
        %p255 = pneg %p62
        %p256 = pneg %p86
        %p257 = pneg %p83
        %p258 = pneg %p107
        %p259 = pneg %p104
        %p260 = pneg %p128
        %p261 = pneg %p125
        %p262 = pneg %p154
        %p263 = pneg %p151
        %s264 = sand.u32 %s141, 1
        %s265 = scalar_lea.sflag [#allocation4], %s264
        %s266 = sand.u32 %s141, 1
        %s267 = smul.addr %s266, 8
        %s268 = scalar_lea.vmem [#allocation8], %s267
        %v269 = vld [vmem:[%s234] sm:$0xff]
        %v270 = vld [vmem:[#allocation5] sm:$0xff]
        %v271 = vld [vmem:[#allocation5 + $0x8] sm:$0xff]
        %v272 = vld [vmem:[#allocation5 + $0x10] sm:$0xff]
        %v273 = vld [vmem:[#allocation5 + $0x18] sm:$0xff]
        %v274 = vld [vmem:[%s2] sm:$0x1]
        %v276 = vlaneseq
        %v277 = vshrl.u32 %v276, 7
        %v278 = vsub.s32 0, %v277
        %v279 = vrot.slane %v274, %v278
        %vm281 = vcmask 261120
        %v283 = vsel %vm281, %v269, 0
        %285 = vmatprep.subr.mxu0 0.0
        %286 = vmatpush1.msra.mxu0 %v270
        %287 = vmatprep.subr.mxu0 0.0
        %288 = vmatpush1.msra.mxu0 %v271
        %289 = vmatprep.subr.mxu0 0.0
        %290 = vmatpush1.msra.mxu0 %v272
        %291 = vmatprep.subr.mxu0 0.0
        %292 = vmatpush1.msra.mxu0 %v273
        %293 = vmatprep.subr.mxu0 0.0
        %294 = vmatpush1.msra.mxu0 0.0
        %295 = vmatprep.subr.mxu0 0.0
        %296 = vmatpush1.msra.mxu0 0.0
        %297 = vmatprep.subr.mxu0 0.0
        %298 = vmatpush1.msra.mxu0 0.0
        %299 = vmatprep.subr.mxu0 0.0
        %300 = vmatpush1.msra.mxu0 0.0
        %301 = vmatprep.subr.mxu0 0.0
        %302 = vmatpush1.msra.mxu0 0.0
        %303 = vmatprep.subr.mxu0 0.0
        %304 = vmatpush1.msra.mxu0 0.0
        %305 = vmatprep.subr.mxu0 0.0
        %306 = vmatpush1.msra.mxu0 0.0
        %307 = vmatprep.subr.mxu0 0.0
        %308 = vmatpush1.msra.mxu0 0.0
        %309 = vmatprep.subr.mxu0 0.0
        %310 = vmatpush1.msra.mxu0 0.0
        %311 = vmatprep.subr.mxu0 0.0
        %312 = vmatpush1.msra.mxu0 0.0
        %313 = vmatprep.subr.mxu0 0.0
        %314 = vmatpush1.msra.mxu0 0.0
        %315 = vmatprep.subr.mxu0 0.0
        %316 = vmatpush1.msra.mxu0 0.0
        %317 = vmatprep.subr.mxu0 0.0
        %318 = vmatpush1.msra.mxu0 0.0
        %319 = vmatprep.subr.mxu0 0.0
        %320 = vmatpush1.msra.mxu0 0.0
        %321 = vmatprep.subr.mxu0 0.0
        %322 = vmatpush1.msra.mxu0 0.0
        %323 = vmatprep.subr.mxu0 0.0
        %324 = vmatpush1.msra.mxu0 0.0
        %325 = vmatprep.subr.mxu0 0.0
        %326 = vmatpush1.msra.mxu0 0.0
        %327 = vmatprep.subr.mxu0 0.0
        %328 = vmatpush1.msra.mxu0 0.0
        %329 = vmatprep.subr.mxu0 0.0
        %330 = vmatpush1.msra.mxu0 0.0
        %331 = vmatprep.subr.mxu0 0.0
        %332 = vmatpush1.msra.mxu0 0.0
        %333 = vmatprep.subr.mxu0 0.0
        %334 = vmatpush1.msra.mxu0 0.0
        %335 = vmatprep.subr.mxu0 0.0
        %336 = vmatpush1.msra.mxu0 0.0
        %337 = vmatprep.subr.mxu0 0.0
        %338 = vmatpush1.msra.mxu0 0.0
        %339 = vmatprep.subr.mxu0 0.0
        %340 = vmatpush1.msra.mxu0 0.0
        %341 = vmatprep.subr.mxu0 0.0
        %342 = vmatpush1.msra.mxu0 0.0
        %343 = vmatprep.subr.mxu0 0.0
        %344 = vmatpush1.msra.mxu0 0.0
        %345 = vmatprep.subr.mxu0 0.0
        %346 = vmatpush1.msra.mxu0 0.0
        %347 = vmatprep.subr.mxu0 0.0
        %348 = vmatpush1.msra.mxu0 0.0
        %349 = vmatprep.mubr.f32.mxu0 0.0
        %350 = vmatmul.mubr.f32.gmra.mrb[0].mxu0 %v283
        %v351 = vpop.f32.mrb[0].mxu0
        %v352 = vadd.f32 %v279, %v351
        %v353 = vpop.f32.mrb[0].mxu0
        %354 = vdwg.mxu0
        %v355 = vmax.f32 %v352, 0.0
        %v356 = vld [vmem:[#allocation7] sm:$0xff]
        %v357 = vld [vmem:[#allocation7 + $0x8] sm:$0xff]
        %v358 = vld [vmem:[#allocation7 + $0x10] sm:$0xff]
        %v359 = vld [vmem:[#allocation7 + $0x18] sm:$0xff]
        %v360 = vld [vmem:[%s4] sm:$0x1]
        %v362 = vlaneseq
        %v363 = vshrl.u32 %v362, 7
        %v364 = vsub.s32 0, %v363
        %v365 = vrot.slane %v360, %v364
        %v368 = vsel %vm281, %v355, 0
        %370 = vmatprep.subr.mxu0 0.0
        %371 = vmatpush1.msra.mxu0 %v356
        %372 = vmatprep.subr.mxu0 0.0
        %373 = vmatpush1.msra.mxu0 %v357
        %374 = vmatprep.subr.mxu0 0.0
        %375 = vmatpush1.msra.mxu0 %v358
        %376 = vmatprep.subr.mxu0 0.0
        %377 = vmatpush1.msra.mxu0 %v359
        %378 = vmatprep.subr.mxu0 0.0
        %379 = vmatpush1.msra.mxu0 0.0
        %380 = vmatprep.subr.mxu0 0.0
        %381 = vmatpush1.msra.mxu0 0.0
        %382 = vmatprep.subr.mxu0 0.0
        %383 = vmatpush1.msra.mxu0 0.0
        %384 = vmatprep.subr.mxu0 0.0
        %385 = vmatpush1.msra.mxu0 0.0
        %386 = vmatprep.subr.mxu0 0.0
        %387 = vmatpush1.msra.mxu0 0.0
        %388 = vmatprep.subr.mxu0 0.0
        %389 = vmatpush1.msra.mxu0 0.0
        %390 = vmatprep.subr.mxu0 0.0
        %391 = vmatpush1.msra.mxu0 0.0
        %392 = vmatprep.subr.mxu0 0.0
        %393 = vmatpush1.msra.mxu0 0.0
        %394 = vmatprep.subr.mxu0 0.0
        %395 = vmatpush1.msra.mxu0 0.0
        %396 = vmatprep.subr.mxu0 0.0
        %397 = vmatpush1.msra.mxu0 0.0
        %398 = vmatprep.subr.mxu0 0.0
        %399 = vmatpush1.msra.mxu0 0.0
        %400 = vmatprep.subr.mxu0 0.0
        %401 = vmatpush1.msra.mxu0 0.0
        %402 = vmatprep.subr.mxu0 0.0
        %403 = vmatpush1.msra.mxu0 0.0
        %404 = vmatprep.subr.mxu0 0.0
        %405 = vmatpush1.msra.mxu0 0.0
        %406 = vmatprep.subr.mxu0 0.0
        %407 = vmatpush1.msra.mxu0 0.0
        %408 = vmatprep.subr.mxu0 0.0
        %409 = vmatpush1.msra.mxu0 0.0
        %410 = vmatprep.subr.mxu0 0.0
        %411 = vmatpush1.msra.mxu0 0.0
        %412 = vmatprep.subr.mxu0 0.0
        %413 = vmatpush1.msra.mxu0 0.0
        %414 = vmatprep.subr.mxu0 0.0
        %415 = vmatpush1.msra.mxu0 0.0
        %416 = vmatprep.subr.mxu0 0.0
        %417 = vmatpush1.msra.mxu0 0.0
        %418 = vmatprep.subr.mxu0 0.0
        %419 = vmatpush1.msra.mxu0 0.0
        %420 = vmatprep.subr.mxu0 0.0
        %421 = vmatpush1.msra.mxu0 0.0
        %422 = vmatprep.subr.mxu0 0.0
        %423 = vmatpush1.msra.mxu0 0.0
        %424 = vmatprep.subr.mxu0 0.0
        %425 = vmatpush1.msra.mxu0 0.0
        %426 = vmatprep.subr.mxu0 0.0
        %427 = vmatpush1.msra.mxu0 0.0
        %428 = vmatprep.subr.mxu0 0.0
        %429 = vmatpush1.msra.mxu0 0.0
        %430 = vmatprep.subr.mxu0 0.0
        %431 = vmatpush1.msra.mxu0 0.0
        %432 = vmatprep.subr.mxu0 0.0
        %433 = vmatpush1.msra.mxu0 0.0
        %434 = vmatprep.mubr.f32.mxu0 0.0
        %435 = vmatmul.mubr.f32.gmra.mrb[0].mxu0 %v368
        %v436 = vpop.f32.mrb[0].mxu0
        %v437 = vadd.f32 %v365, %v436
        %v438 = vpop.f32.mrb[0].mxu0
        %439 = vdwg.mxu0
        %v440 = vxor.u32 %v437, 2147483648
        %v441 = vmul.f32 %v440, 1.442695
        %v442 = vpow.pop %v441
        %v443 = vadd.f32 %v442, 1.0
        %v444 = vrcp.pop %v443
        %v445 = vmul.f32 1.0, %v444
        %v446 = vlaneseq
        %v447 = vand.u32 %v446, 127
        %vm448 = vcmp.lt.s32.totalorder %v447, 10
        %v449 = vsel %vm448, %v445, -1e+30
        %450 = vmax.xlane.f32.xlu0 %v449
        %v451 = vpop.xlane.xlu0 %450
        %v452 = vsub.f32 %v445, %v451
        %v453 = vmul.f32 %v452, 1.442695
        %v454 = vpow.pop %v453
        %v455 = vsel %vm448, %v454, 0.0
        %456 = vadd.xlane.f32.xlu0 %v455
        %v457 = vpop.xlane.xlu0 %456
        %v458 = vlog2.pop %v457
        %v459 = vmul.f32 %v458, 0.6931472
        %v460 = vsub.f32 %v452, %v459
        %461 = vst [vmem:[%s268] sm:$0xff] %v460
        %s462 = sand.u32 %s141, 1
        %s463 = scalar_lea.sflag [#allocation4], %s462
        %s464 = sand.u32 %s141, 1
        %s465 = smul.addr %s464, 8
        %s466 = scalar_lea.vmem [#allocation8], %s465
        // Predicated region
        $region53: #{tpu_custom_call.1} parent=39 // pred_check
          %p467 = pneg %p151
        $region54: #{tpu_custom_call.1} parent=39 // pred_check_branch
          %469 = sbr.rel (%p467) target = $region56
        $region55: #{tpu_custom_call.1} parent=39 // pred_region
          %s471 = ssub.s32 128, 128
          %472 = vsyncadd %s463, %s471
          %s473 = smul.addr %s23, 128
          %s474 = scalar_lea.hbm %s5, %s473
          %s476 = sshll.u32 %s466, 4
          %s477 = int_to_ptr.vmem [resolvable:$true] %s476
          %479 = dma.vmem_to_hbm [thread:$0]  %s477, 128, %s474, %s463
        $region56: #{tpu_custom_call.1} parent=39 // pred_fallthru
          _
      $region40: #{tpu_custom_call.1} parent=5 // pred_fallthru
        _
      %p480 = scmp.le.s32.totalorder 2, %s18
      // Predicated region
      $region57: #{tpu_custom_call.1} parent=5 // pred_check
        %p481 = pneg %p480
      $region58: #{tpu_custom_call.1} parent=5 // pred_check_branch
        %483 = sbr.rel (%p481) target = $region60
      $region59: #{tpu_custom_call.1} parent=5 // pred_region
        %s484 = ssub.s32 %s18, 2
        // Predicated region
        $region61: #{tpu_custom_call.1} parent=59 // pred_check
          %p485 = pneg %p157
        $region62: #{tpu_custom_call.1} parent=59 // pred_check_branch
          %487 = sbr.rel (%p485) target = $region64
        $region63: #{tpu_custom_call.1} parent=59 // pred_region
          %s488 = sand.u32 %s142, 1
          %s489 = scalar_lea.sflag [#allocation4], %s488
          %s490 = sand.u32 %s142, 1
          %s491 = smul.addr %s490, 8
          %s492 = scalar_lea.vmem [#allocation8], %s491
          %493 = dma.done %s489, 128
        $region64: #{tpu_custom_call.1} parent=59 // pred_fallthru
          _
      $region60: #{tpu_custom_call.1} parent=5 // pred_fallthru
        _
    $region6: #{tpu_custom_call.1} parent=1 // loop_footer
      %s22 = sadd.s32 1, %s18
    $region7: #{tpu_custom_call.1} parent=1 // loop_footer_branch
      %17 = sbr.rel target = $region3
    $region8: #{tpu_custom_call.1} parent=1 // loop_exit
      _
    %494 = vsyncpa [#allocation3], 1
    %s495 = scalar_lea.sflag [#allocation3], 1
    %496 = vsyncpa %s495, 1
    %497 = vsyncpa [#allocation6], 1
    %498 = vsyncpa [#allocation4], 1
    %s499 = scalar_lea.sflag [#allocation4], 1
    %500 = vsyncpa %s499, 1

</llo_original>
